<compile_context>
chip_gen: v7x
topology: tpu7x:2x2x1
jax: 0.10.0
libtpu: 0.0.40
codegen_flags: <defaults>
</compile_context>

<pallas_src>
import functools

import jax
import jax.numpy as jnp
from jax import lax
from jax.experimental import pallas as pl
from jax.experimental.pallas import tpu as pltpu


def _round_up(a, b):
    return (a + b - 1) // b * b


def _classifier_kernel(x_ref, w_ref, b_ref, o_ref):
    # x_ref: (TM, in_dim), w_ref: (N_pad, in_dim)  (native PyTorch layout),
    # b_ref: (1, N_pad),   o_ref: (TM, N_pad)
    # Contract over the last dim of BOTH operands -> MXU handles the
    # transposed-RHS contraction natively (no transpose materialized).
    acc = lax.dot_general(
        x_ref[...], w_ref[...],
        dimension_numbers=(((1,), (1,)), ((), ())),
        preferred_element_type=jnp.float32,
    )
    acc = acc + b_ref[...]            # broadcast (1, N_pad) bias over rows (VPU)
    acc = jnp.maximum(acc, 0.0)       # relu (VPU)
    out = jax.nn.sigmoid(acc)         # logistic -> EUP, off the VALU slot
    o_ref[...] = out.astype(o_ref.dtype)


@functools.partial(jax.jit, static_argnames=("tm_target",))
def classifier_ssl_all(x, weight, bias, *, tm_target=256):
    """x: (B, in_dim) f32; weight: (out_dim, in_dim) f32 (PyTorch nn.Linear
    layout); bias: (out_dim,) f32.  Returns sigmoid(relu(x @ W.T + b)),
    shape (B, out_dim) f32."""
    B, in_dim = x.shape
    out_dim, in_dim_w = weight.shape
    assert in_dim == in_dim_w, "weight / input feature-dim mismatch"

    # Lane-dense output: pad the out_dim axis (weight rows, bias, output cols)
    # to a multiple of 128 once here; slice back after the kernel.
    n_pad = _round_up(max(out_dim, 128), 128)

    # Batch tile: multiple of 8 sublanes, shrunk if the working set would blow
    # the VMEM budget (resident weight + bias, double-buffered x and out).
    def ws_bytes(tm):
        return 4 * (2 * tm * in_dim       # double-buffered x tiles
                    + 2 * tm * n_pad      # double-buffered output tiles
                    + n_pad * in_dim      # resident weight
                    + n_pad)              # resident bias

    tm = min(tm_target, _round_up(B, 8))
    tm = max(_round_up(tm, 8), 8)
    vmem_budget = 40 * 1024 * 1024        # conservative: fits v7x's 64 MiB VMEM
    while tm > 8 and ws_bytes(tm) > vmem_budget:
        tm //= 2
    tm = max(tm, 8)

    b_padded = _round_up(B, tm)

    x_p = x if b_padded == B else jnp.pad(x, ((0, b_padded - B), (0, 0)))
    w_p = weight if n_pad == out_dim else jnp.pad(
        weight, ((0, n_pad - out_dim), (0, 0)))
    bias_p = bias if n_pad == out_dim else jnp.pad(bias, (0, n_pad - out_dim))
    bias_p = bias_p.reshape(1, n_pad)

    grid = (b_padded // tm,)
    vmem_limit = int(min(max(2 * ws_bytes(tm), 32 * 1024 * 1024),
                         48 * 1024 * 1024))

    out = pl.pallas_call(
        _classifier_kernel,
        out_shape=jax.ShapeDtypeStruct((b_padded, n_pad), x.dtype),
        grid_spec=pltpu.PrefetchScalarGridSpec(
            num_scalar_prefetch=0,
            grid=grid,
            in_specs=[
                # x: stream one batch tile per grid step.
                pl.BlockSpec((tm, in_dim), lambda i: (i, 0)),
                # weight / bias: constant block index -> stay resident in VMEM.
                pl.BlockSpec((n_pad, in_dim), lambda i: (0, 0)),
                pl.BlockSpec((1, n_pad), lambda i: (0, 0)),
            ],
            out_specs=pl.BlockSpec((tm, n_pad), lambda i: (i, 0)),
        ),
        compiler_params=pltpu.CompilerParams(
            # Batch tiles are independent -> parallel (2x on v7x's 2 TCs).
            dimension_semantics=("parallel",),
            vmem_limit_bytes=vmem_limit,
        ),
    )(x_p, w_p, bias_p)

    return out[:B, :out_dim]


if __name__ == "__main__":
    # Small shapes consistent with the module: in_dim=32, out_dim=16, batch=8.
    B, in_dim, out_dim = 8, 32, 16

    key = jax.random.PRNGKey(0)
    k_x, k_w, k_b = jax.random.split(key, 3)

    x = jax.random.normal(k_x, (B, in_dim), dtype=jnp.float32)
    # Deterministic synthetic parameters (shapes match nn.Linear(in_dim, out_dim)).
    weight = jax.random.normal(k_w, (out_dim, in_dim), dtype=jnp.float32) * 0.1
    bias = jax.random.normal(k_b, (out_dim,), dtype=jnp.float32) * 0.1

    out = classifier_ssl_all(x, weight, bias)
    out = jax.block_until_ready(out)

    # Reference check in plain JAX (same math as the PyTorch forward).
    ref = jax.nn.sigmoid(jnp.maximum(x @ weight.T + bias, 0.0))
    assert out.shape == (B, out_dim)
    assert jnp.allclose(out, ref, atol=1e-5, rtol=1e-5)

    print("KERNEL_OK")
</pallas_src>

<mosaic_0001>
module attributes {stable_mosaic.version = 11 : i64} {
  func.func @_classifier_kernel(%arg0: i32, %arg1: memref<8x32xf32, #tpu.memory_space<vmem>>, %arg2: memref<128x32xf32, #tpu.memory_space<vmem>>, %arg3: memref<1x128xf32, #tpu.memory_space<vmem>>, %arg4: memref<8x128xf32, #tpu.memory_space<vmem>>) attributes {dimension_semantics = [#tpu.dimension_semantics<parallel>], iteration_bounds = array<i64: 1>, scalar_prefetch = 0 : i64, scratch_operands = 0 : i64, tpu.core_type = #tpu.core_type<tc>, window_params = [{transform_indices = @transform_0, window_bounds = array<i64: 8, 32>}, {pipeline_mode = #tpu.pipeline_mode<synchronous>, transform_indices = @transform_1, window_bounds = array<i64: 128, 32>}, {pipeline_mode = #tpu.pipeline_mode<synchronous>, transform_indices = @transform_2, window_bounds = array<i64: 1, 128>}, {transform_indices = @transform_3, window_bounds = array<i64: 8, 128>}]} {
    %c0 = arith.constant 0 : index
    %c0_0 = arith.constant 0 : index
    %0 = vector.load %arg1[%c0, %c0_0] : memref<8x32xf32, #tpu.memory_space<vmem>>, vector<8x32xf32>
    %c0_1 = arith.constant 0 : index
    %c0_2 = arith.constant 0 : index
    %1 = vector.load %arg2[%c0_1, %c0_2] : memref<128x32xf32, #tpu.memory_space<vmem>>, vector<128x32xf32>
    %cst = arith.constant dense<0.000000e+00> : vector<8x128xf32>
    %2 = tpu.matmul %0, %1, %cst {dimension_numbers = #tpu.dot_dimension_numbers<[1], [1], [0], [0], [0, 0, 1, 0], [], []>} : vector<8x32xf32>, vector<128x32xf32>, vector<8x128xf32> -> vector<8x128xf32>
    %c0_3 = arith.constant 0 : index
    %c0_4 = arith.constant 0 : index
    %3 = vector.load %arg3[%c0_3, %c0_4] : memref<1x128xf32, #tpu.memory_space<vmem>>, vector<1x128xf32>
    %4 = vector.broadcast %3 : vector<1x128xf32> to vector<8x128xf32>
    %5 = arith.addf %2, %4 : vector<8x128xf32>
    %cst_5 = arith.constant 0.000000e+00 : f32
    %6 = vector.broadcast %cst_5 : f32 to vector<8x128xf32>
    %7 = arith.maximumf %5, %6 : vector<8x128xf32>
    %8 = arith.negf %7 : vector<8x128xf32>
    %9 = math.exp %8 : vector<8x128xf32>
    %cst_6 = arith.constant 1.000000e+00 : f32
    %10 = vector.broadcast %cst_6 : f32 to vector<8x128xf32>
    %11 = arith.addf %10, %9 : vector<8x128xf32>
    %12 = arith.divf %10, %11 : vector<8x128xf32>
    %c0_7 = arith.constant 0 : index
    %c0_8 = arith.constant 0 : index
    %13 = vector.load %arg4[%c0_7, %c0_8] : memref<8x128xf32, #tpu.memory_space<vmem>>, vector<8x128xf32>
    tpu.vector_store %arg4[%c0_7, %c0_8], %12 {strides = array<i32>} : memref<8x128xf32, #tpu.memory_space<vmem>>, vector<8x128xf32>,
    return
  }
  func.func @transform_0(%arg0: i32) -> (i32, i32) {
    %c0_i32 = arith.constant 0 : i32
    %c0_i32_0 = arith.constant 0 : i32
    return %arg0, %c0_i32 : i32, i32
  }
  func.func @transform_1(%arg0: i32) -> (i32, i32) {
    %c0_i32 = arith.constant 0 : i32
    %c0_i32_0 = arith.constant 0 : i32
    %c0_i32_1 = arith.constant 0 : i32
    return %c0_i32, %c0_i32_0 : i32, i32
  }
  func.func @transform_2(%arg0: i32) -> (i32, i32) {
    %c0_i32 = arith.constant 0 : i32
    %c0_i32_0 = arith.constant 0 : i32
    %c0_i32_1 = arith.constant 0 : i32
    return %c0_i32, %c0_i32_0 : i32, i32
  }
  func.func @transform_3(%arg0: i32) -> (i32, i32) {
    %c0_i32 = arith.constant 0 : i32
    %c0_i32_0 = arith.constant 0 : i32
    return %arg0, %c0_i32 : i32, i32
  }
}

</mosaic_0001>

<llo_original>
// kernel: classifier_ssl_all.1
$region0: #{classifier_ssl_all.1}
  #allocation0 [shape = 'u32[]', space=smem, size = 0x4, offset = 0x4, fixed_abs, tag = 'smem constant byte address 0x4 - core index']
  #allocation1 [shape = 'u32[144,128]{1,0:T(1,128)}', space=vmem, size = 0x12000, scoped, tag = 'internal scratch']
  %s0 = inlined_call_operand.vmem [shape: f32[8,32], index: 0, kind: input, shape index: {}]
  %s1 = inlined_call_operand.vmem [shape: f32[128,32], index: 1, kind: input, shape index: {}]
  %s2 = inlined_call_operand.vmem [shape: f32[1,128], index: 2, kind: input, shape index: {}]
  %s3 = inlined_call_operand.hbm [shape: f32[8,128], index: 3, kind: output, shape index: {}]
  %s4 = sld [smem:[#allocation0]]
  $region22: #{classifier_ssl_all.1} parent=0
    _
  %s6 = ssub.s32 1, %s4
  %s7 = scalar_select 0, %s6, %s4
  $region1: #{classifier_ssl_all.1} parent=0
    #allocation2 [shape = 'u8[4096]{0}', space=vmem, size = 0x1000, scoped, tag = 'output window, operand 0, single buffered']
    #allocation3 [shape = 's32[1]{0}', space=sflag, size = 0x4, scoped, tag = 'scoped memory for classifier_ssl_all.1']
    %8 = vsyncpa [#allocation3], 0
    // Predicated region
    $region2: #{classifier_ssl_all.1} parent=1 // pred_check
      _
    $region3: #{classifier_ssl_all.1} parent=1 // pred_check_branch
      %10 = sbr.rel (0) target = $region5
    $region4: #{classifier_ssl_all.1} parent=1 // pred_region
      _
    $region5: #{classifier_ssl_all.1} parent=1 // pred_fallthru
      _
    // Predicated region
    $region6: #{classifier_ssl_all.1} parent=1 // pred_check
      _
    $region7: #{classifier_ssl_all.1} parent=1 // pred_check_branch
      %12 = sbr.rel (0) target = $region9
    $region8: #{classifier_ssl_all.1} parent=1 // pred_region
      _
    $region9: #{classifier_ssl_all.1} parent=1 // pred_fallthru
      _
    // Predicated region
    $region10: #{classifier_ssl_all.1} parent=1 // pred_check
      _
    $region11: #{classifier_ssl_all.1} parent=1 // pred_check_branch
      %14 = sbr.rel (0) target = $region13
    $region12: #{classifier_ssl_all.1} parent=1 // pred_region
      _
    $region13: #{classifier_ssl_all.1} parent=1 // pred_fallthru
      _
    %v15 = vld [vmem:[%s0] sm:$0xff]
    %v16 = vld [vmem:[%s1] sm:$0xff]
    %v17 = vld [vmem:[%s1 + $0x8] sm:$0xff]
    %v18 = vld [vmem:[%s1 + $0x10] sm:$0xff]
    %v19 = vld [vmem:[%s1 + $0x18] sm:$0xff]
    %v20 = vld [vmem:[%s1 + $0x20] sm:$0xff]
    %v21 = vld [vmem:[%s1 + $0x28] sm:$0xff]
    %v22 = vld [vmem:[%s1 + $0x30] sm:$0xff]
    %v23 = vld [vmem:[%s1 + $0x38] sm:$0xff]
    %v24 = vld [vmem:[%s1 + $0x40] sm:$0xff]
    %v25 = vld [vmem:[%s1 + $0x48] sm:$0xff]
    %v26 = vld [vmem:[%s1 + $0x50] sm:$0xff]
    %v27 = vld [vmem:[%s1 + $0x58] sm:$0xff]
    %v28 = vld [vmem:[%s1 + $0x60] sm:$0xff]
    %v29 = vld [vmem:[%s1 + $0x68] sm:$0xff]
    %v30 = vld [vmem:[%s1 + $0x70] sm:$0xff]
    %v31 = vld [vmem:[%s1 + $0x78] sm:$0xff]
    %v32 = vld [vmem:[%s2] sm:$0x1]
    %v34 = vlaneseq
    %v35 = vshrl.u32 %v34, 7
    %v36 = vsub.s32 0, %v35
    %v37 = vrot.slane %v32, %v36
    %vm39 = vcmask 261120
    %v41 = vsel %vm39, %v15, 0
    %v44 = vsel %vm39, %v16, 0
    %v47 = vsel %vm39, %v17, 0
    %v50 = vsel %vm39, %v18, 0
    %v53 = vsel %vm39, %v19, 0
    %v56 = vsel %vm39, %v20, 0
    %v59 = vsel %vm39, %v21, 0
    %v62 = vsel %vm39, %v22, 0
    %v65 = vsel %vm39, %v23, 0
    %v68 = vsel %vm39, %v24, 0
    %v71 = vsel %vm39, %v25, 0
    %v74 = vsel %vm39, %v26, 0
    %v77 = vsel %vm39, %v27, 0
    %v80 = vsel %vm39, %v28, 0
    %v83 = vsel %vm39, %v29, 0
    %v86 = vsel %vm39, %v30, 0
    %v89 = vsel %vm39, %v31, 0
    %91 = vmatprep.subr.mxu0 0.0
    %92 = vmatpush1.xpose.msra.mxu0 %v44
    %93 = vmatprep.subr.mxu0 0.0
    %94 = vmatpush1.xpose.msra.mxu0 %v47
    %95 = vmatprep.subr.mxu0 0.0
    %96 = vmatpush1.xpose.msra.mxu0 %v50
    %97 = vmatprep.subr.mxu0 0.0
    %98 = vmatpush1.xpose.msra.mxu0 %v53
    %99 = vmatprep.subr.mxu0 0.0
    %100 = vmatpush1.xpose.msra.mxu0 %v56
    %101 = vmatprep.subr.mxu0 0.0
    %102 = vmatpush1.xpose.msra.mxu0 %v59
    %103 = vmatprep.subr.mxu0 0.0
    %104 = vmatpush1.xpose.msra.mxu0 %v62
    %105 = vmatprep.subr.mxu0 0.0
    %106 = vmatpush1.xpose.msra.mxu0 %v65
    %107 = vmatprep.subr.mxu0 0.0
    %108 = vmatpush1.xpose.msra.mxu0 %v68
    %109 = vmatprep.subr.mxu0 0.0
    %110 = vmatpush1.xpose.msra.mxu0 %v71
    %111 = vmatprep.subr.mxu0 0.0
    %112 = vmatpush1.xpose.msra.mxu0 %v74
    %113 = vmatprep.subr.mxu0 0.0
    %114 = vmatpush1.xpose.msra.mxu0 %v77
    %115 = vmatprep.subr.mxu0 0.0
    %116 = vmatpush1.xpose.msra.mxu0 %v80
    %117 = vmatprep.subr.mxu0 0.0
    %118 = vmatpush1.xpose.msra.mxu0 %v83
    %119 = vmatprep.subr.mxu0 0.0
    %120 = vmatpush1.xpose.msra.mxu0 %v86
    %121 = vmatprep.subr.mxu0 0.0
    %122 = vmatpush1.xpose.msra.mxu0 %v89
    %123 = vmatprep.subr.mxu0 0.0
    %124 = vmatpush1.xpose.msra.mxu0 0.0
    %125 = vmatprep.subr.mxu0 0.0
    %126 = vmatpush1.xpose.msra.mxu0 0.0
    %127 = vmatprep.subr.mxu0 0.0
    %128 = vmatpush1.xpose.msra.mxu0 0.0
    %129 = vmatprep.subr.mxu0 0.0
    %130 = vmatpush1.xpose.msra.mxu0 0.0
    %131 = vmatprep.subr.mxu0 0.0
    %132 = vmatpush1.xpose.msra.mxu0 0.0
    %133 = vmatprep.subr.mxu0 0.0
    %134 = vmatpush1.xpose.msra.mxu0 0.0
    %135 = vmatprep.subr.mxu0 0.0
    %136 = vmatpush1.xpose.msra.mxu0 0.0
    %137 = vmatprep.subr.mxu0 0.0
    %138 = vmatpush1.xpose.msra.mxu0 0.0
    %139 = vmatprep.subr.mxu0 0.0
    %140 = vmatpush1.xpose.msra.mxu0 0.0
    %141 = vmatprep.subr.mxu0 0.0
    %142 = vmatpush1.xpose.msra.mxu0 0.0
    %143 = vmatprep.subr.mxu0 0.0
    %144 = vmatpush1.xpose.msra.mxu0 0.0
    %145 = vmatprep.subr.mxu0 0.0
    %146 = vmatpush1.xpose.msra.mxu0 0.0
    %147 = vmatprep.subr.mxu0 0.0
    %148 = vmatpush1.xpose.msra.mxu0 0.0
    %149 = vmatprep.subr.mxu0 0.0
    %150 = vmatpush1.xpose.msra.mxu0 0.0
    %151 = vmatprep.subr.mxu0 0.0
    %152 = vmatpush1.xpose.msra.mxu0 0.0
    %153 = vmatprep.subr.mxu0 0.0
    %154 = vmatpush1.xpose.msra.mxu0 0.0
    %155 = vmatprep.mubr.f32.mxu0 0.0
    %156 = vmatmul.mubr.f32.gmra.mrb[0].mxu0 %v41
    %v157 = vpop.f32.mrb[0].mxu0
    %v158 = vadd.f32 %v37, %v157
    %v159 = vpop.f32.mrb[0].mxu0
    %160 = vdwg.mxu0
    %v161 = vmax.f32 %v158, 0.0
    %v162 = vxor.u32 %v161, 2147483648
    %v163 = vmul.f32 %v162, 1.442695
    %v164 = vpow.pop %v163
    %v165 = vadd.f32 %v164, 1.0
    %v166 = vrcp.pop %v165
    %v167 = vmul.f32 1.0, %v166
    %168 = vst [vmem:[#allocation2] sm:$0xff] %v167
    // Predicated region
    $region14: #{classifier_ssl_all.1} parent=1 // pred_check
      _
    $region15: #{classifier_ssl_all.1} parent=1 // pred_check_branch
      %170 = sbr.rel (0) target = $region17
    $region16: #{classifier_ssl_all.1} parent=1 // pred_region
      %s172 = ssub.s32 128, 128
      %173 = vsyncadd [#allocation3], %s172
      %s175 = sshll.u32 [#allocation2], 4
      %s176 = int_to_ptr.vmem [resolvable:$true] %s175
      %178 = dma.vmem_to_hbm [thread:$0]  %s176, 128, %s3, [#allocation3]
    $region17: #{classifier_ssl_all.1} parent=1 // pred_fallthru
      _
    // Predicated region
    $region18: #{classifier_ssl_all.1} parent=1 // pred_check
      _
    $region19: #{classifier_ssl_all.1} parent=1 // pred_check_branch
      %180 = sbr.rel (0) target = $region21
    $region20: #{classifier_ssl_all.1} parent=1 // pred_region
      %181 = dma.done [#allocation3], 128
    $region21: #{classifier_ssl_all.1} parent=1 // pred_fallthru
      _
    %182 = vsyncpa [#allocation3], 1

</llo_original>
